<compile_context>
chip_gen: v7x
topology: tpu7x:2x2x1
jax: 0.10.0
libtpu: 0.0.40
codegen_flags: <defaults>
</compile_context>

<pallas_src>
import functools

import jax
import jax.numpy as jnp
from jax.experimental import pallas as pl
from jax.experimental.pallas import tpu as pltpu

_WINDOW_SIZE = 11
_SIGMA = 1.5


def _gaussian_1d(window_size: int, sigma: float) -> jnp.ndarray:
    x = jnp.arange(window_size, dtype=jnp.float32)
    g = jnp.exp(-((x - window_size // 2) ** 2) / (2.0 * sigma ** 2))
    return g / jnp.sum(g)


def _band_matrix(out_dim: int, in_dim: int, g: jnp.ndarray,
                 window_size: int) -> jnp.ndarray:
    # B[i, k] = g[k - i] if 0 <= k - i < window_size else 0
    i = jnp.arange(out_dim)[:, None]
    k = jnp.arange(in_dim)[None, :]
    d = k - i
    valid = (d >= 0) & (d < window_size)
    return jnp.where(valid, g[jnp.clip(d, 0, window_size - 1)], 0.0).astype(
        jnp.float32)


def _ssim_kernel(x1_ref, x2_ref, bh_ref, bwd_ref, out_ref):
    # x1/x2: (H, C*W) in native dtype; bh: (H, H); bwd: (5*C*W, 5*C*W)
    x1 = x1_ref[...].astype(jnp.float32)
    x2 = x2_ref[...].astype(jnp.float32)
    bh = bh_ref[...]
    bwd = bwd_ref[...]

    cw = x1.shape[1]

    # Five quantities stacked along the lane axis -> one lane-dense operand.
    q = jnp.concatenate([x1, x2, x1 * x1, x2 * x2, x1 * x2], axis=1)  # (H,5CW)

    # Row blur then column blur: exactly two MXU matmuls for all 5 quantities
    # of all channels.
    t = jnp.dot(bh, q, preferred_element_type=jnp.float32)        # (H, 5CW)
    blurred = jnp.dot(t, bwd, preferred_element_type=jnp.float32)  # (H, 5CW)

    mu1 = blurred[:, 0 * cw:1 * cw]
    mu2 = blurred[:, 1 * cw:2 * cw]
    e11 = blurred[:, 2 * cw:3 * cw]
    e22 = blurred[:, 3 * cw:4 * cw]
    e12 = blurred[:, 4 * cw:5 * cw]

    mu1_sq = mu1 * mu1
    mu2_sq = mu2 * mu2
    mu1_mu2 = mu1 * mu2
    sigma1_sq = e11 - mu1_sq
    sigma2_sq = e22 - mu2_sq
    sigma12 = e12 - mu1_mu2

    c1 = 0.01 ** 2
    c2 = 0.03 ** 2
    numer = (2.0 * mu1_mu2 + c1) * (2.0 * sigma12 + c2)
    denom = (mu1_sq + mu2_sq + c1) * (sigma1_sq + sigma2_sq + c2)
    ssim_map = numer * pl.reciprocal(denom, approx=False)

    s = jnp.sum(ssim_map)  # per-sample sum over (C, H, W)
    out_ref[...] = jnp.full(out_ref.shape, s, dtype=out_ref.dtype)


@functools.partial(jax.jit, static_argnames=("window_size", "size_average"))
def ssim(img1, img2, window_size: int = _WINDOW_SIZE,
         size_average: bool = True):
    """SSIM between two NCHW images, matching the PyTorch SSIM module."""
    N, C, H, W = img1.shape
    assert img2.shape == img1.shape

    p = window_size // 2
    g = _gaussian_1d(window_size, _SIGMA)

    # Cropped band matrices (mathematically identical to zero-padded 'same'
    # conv: the padded rows/cols are zero, so their band columns drop out).
    bh = _band_matrix(H, H + 2 * p, g, window_size)[:, p:p + H]        # (H, H)
    bwt = _band_matrix(W, W + 2 * p, g, window_size)[:, p:p + W].T     # (W, W)

    cw = C * W
    # Block-diagonal column-blur operator shared by all 5 quantities x C
    # channels packed along lanes.
    bwd = jnp.kron(jnp.eye(5 * C, dtype=jnp.float32), bwt)   # (5CW, 5CW)

    # Fold channels into the lane axis: (N, C, H, W) -> (N, H, C*W).
    x1 = img1.transpose(0, 2, 1, 3).reshape(N, H, cw)
    x2 = img2.transpose(0, 2, 1, 3).reshape(N, H, cw)

    img_spec = pl.BlockSpec((None, H, cw), lambda n: (n, 0, 0))
    bh_spec = pl.BlockSpec((H, H), lambda n: (0, 0))
    bwd_spec = pl.BlockSpec((5 * cw, 5 * cw), lambda n: (0, 0))
    out_spec = pl.BlockSpec((None, 8, 128), lambda n: (n, 0, 0))

    acc = pl.pallas_call(
        _ssim_kernel,
        out_shape=jax.ShapeDtypeStruct((N, 8, 128), jnp.float32),
        grid_spec=pltpu.PrefetchScalarGridSpec(
            num_scalar_prefetch=0,
            grid=(N,),
            in_specs=[img_spec, img_spec, bh_spec, bwd_spec],
            out_specs=out_spec,
        ),
        compiler_params=pltpu.CompilerParams(
            dimension_semantics=("parallel",)),
    )(x1, x2, bh, bwd)

    per_sample_sum = acc[:, 0, 0]  # sum of ssim_map over (C, H, W) per sample
    if size_average:
        return jnp.sum(per_sample_sum) / (N * C * H * W)
    else:
        return per_sample_sum / (C * H * W)


def _ssim_reference(img1, img2, window_size: int = _WINDOW_SIZE,
                    size_average: bool = True):
    """Pure-JAX reference (padded separable-band-matrix math, no Pallas)."""
    N, C, H, W = img1.shape
    p = window_size // 2
    Hp, Wp = H + 2 * p, W + 2 * p
    g = _gaussian_1d(window_size, _SIGMA)
    bh = _band_matrix(H, Hp, g, window_size)
    bw = _band_matrix(W, Wp, g, window_size)
    pad = lambda x: jnp.pad(x, ((0, 0), (0, 0), (p, p), (p, p)))
    blur = lambda x: jnp.einsum("hi,ncij,wj->nchw", bh, pad(x), bw)
    mu1, mu2 = blur(img1), blur(img2)
    s1 = blur(img1 * img1) - mu1 * mu1
    s2 = blur(img2 * img2) - mu2 * mu2
    s12 = blur(img1 * img2) - mu1 * mu2
    c1, c2 = 0.01 ** 2, 0.03 ** 2
    m = ((2 * mu1 * mu2 + c1) * (2 * s12 + c2)) / (
        (mu1 * mu1 + mu2 * mu2 + c1) * (s1 + s2 + c2))
    return m.mean() if size_average else m.mean(axis=(1, 2, 3))


if __name__ == "__main__":
    key = jax.random.PRNGKey(0)
    k1, k2 = jax.random.split(key)
    N, C, H, W = 2, 4, 16, 16
    img1 = jax.random.uniform(k1, (N, C, H, W), dtype=jnp.float32)
    img2 = jax.random.uniform(k2, (N, C, H, W), dtype=jnp.float32)

    out = ssim(img1, img2)                 # size_average=True (module default)
    out = jax.block_until_ready(out)

    ref = _ssim_reference(img1, img2)
    assert jnp.allclose(out, ref, atol=1e-5, rtol=1e-5), (out, ref)

    # also exercise size_average=False path (per-sample means)
    out_ns = jax.block_until_ready(ssim(img1, img2, size_average=False))
    ref_ns = _ssim_reference(img1, img2, size_average=False)
    assert jnp.allclose(out_ns, ref_ns, atol=1e-5, rtol=1e-5), (out_ns, ref_ns)

    print("KERNEL_OK")
</pallas_src>

<mosaic_0001>
module attributes {stable_mosaic.version = 11 : i64} {
  func.func @_ssim_kernel(%arg0: i32, %arg1: memref<1x16x64xf32, #tpu.memory_space<vmem>>, %arg2: memref<1x16x64xf32, #tpu.memory_space<vmem>>, %arg3: memref<16x16xf32, #tpu.memory_space<vmem>>, %arg4: memref<320x320xf32, #tpu.memory_space<vmem>>, %arg5: memref<1x8x128xf32, #tpu.memory_space<vmem>>) attributes {dimension_semantics = [#tpu.dimension_semantics<parallel>], iteration_bounds = array<i64: 2>, scalar_prefetch = 0 : i64, scratch_operands = 0 : i64, tpu.core_type = #tpu.core_type<tc>, window_params = [{transform_indices = @transform_0, window_bounds = array<i64: 1, 16, 64>}, {transform_indices = @transform_1, window_bounds = array<i64: 1, 16, 64>}, {pipeline_mode = #tpu.pipeline_mode<synchronous>, transform_indices = @transform_2, window_bounds = array<i64: 16, 16>}, {pipeline_mode = #tpu.pipeline_mode<synchronous>, transform_indices = @transform_3, window_bounds = array<i64: 320, 320>}, {transform_indices = @transform_4, window_bounds = array<i64: 1, 8, 128>}]} {
    %c0 = arith.constant 0 : index
    %c0_0 = arith.constant 0 : index
    %c0_1 = arith.constant 0 : index
    %0 = vector.load %arg1[%c0, %c0_0, %c0_1] : memref<1x16x64xf32, #tpu.memory_space<vmem>>, vector<1x16x64xf32>
    %1 = vector.shape_cast %0 : vector<1x16x64xf32> to vector<16x64xf32>
    %c0_2 = arith.constant 0 : index
    %c0_3 = arith.constant 0 : index
    %c0_4 = arith.constant 0 : index
    %2 = vector.load %arg2[%c0_2, %c0_3, %c0_4] : memref<1x16x64xf32, #tpu.memory_space<vmem>>, vector<1x16x64xf32>
    %3 = vector.shape_cast %2 : vector<1x16x64xf32> to vector<16x64xf32>
    %c0_5 = arith.constant 0 : index
    %c0_6 = arith.constant 0 : index
    %4 = vector.load %arg3[%c0_5, %c0_6] : memref<16x16xf32, #tpu.memory_space<vmem>>, vector<16x16xf32>
    %c0_7 = arith.constant 0 : index
    %c0_8 = arith.constant 0 : index
    %5 = vector.load %arg4[%c0_7, %c0_8] : memref<320x320xf32, #tpu.memory_space<vmem>>, vector<320x320xf32>
    %6 = arith.mulf %1, %1 : vector<16x64xf32>
    %7 = arith.mulf %3, %3 : vector<16x64xf32>
    %8 = arith.mulf %1, %3 : vector<16x64xf32>
    %9 = tpu.concatenate %1, %3, %6, %7, %8 in 1 : vector<16x64xf32>, vector<16x64xf32>, vector<16x64xf32>, vector<16x64xf32>, vector<16x64xf32> -> vector<16x320xf32>
    %cst = arith.constant dense<0.000000e+00> : vector<16x320xf32>
    %10 = tpu.matmul %4, %9, %cst {dimension_numbers = #tpu.dot_dimension_numbers<[1], [0], [0], [1], [0, 0, 1, 1], [], []>} : vector<16x16xf32>, vector<16x320xf32>, vector<16x320xf32> -> vector<16x320xf32>
    %cst_9 = arith.constant dense<0.000000e+00> : vector<16x320xf32>
    %11 = tpu.matmul %10, %5, %cst_9 {dimension_numbers = #tpu.dot_dimension_numbers<[1], [0], [0], [1], [0, 0, 1, 1], [], []>} : vector<16x320xf32>, vector<320x320xf32>, vector<16x320xf32> -> vector<16x320xf32>
    %12 = vector.extract_strided_slice %11 {offsets = [0, 0], sizes = [16, 64], strides = [1, 1]} : vector<16x320xf32> to vector<16x64xf32>
    %13 = vector.extract_strided_slice %11 {offsets = [0, 64], sizes = [16, 64], strides = [1, 1]} : vector<16x320xf32> to vector<16x64xf32>
    %14 = vector.extract_strided_slice %11 {offsets = [0, 128], sizes = [16, 64], strides = [1, 1]} : vector<16x320xf32> to vector<16x64xf32>
    %15 = vector.extract_strided_slice %11 {offsets = [0, 192], sizes = [16, 64], strides = [1, 1]} : vector<16x320xf32> to vector<16x64xf32>
    %16 = vector.extract_strided_slice %11 {offsets = [0, 256], sizes = [16, 64], strides = [1, 1]} : vector<16x320xf32> to vector<16x64xf32>
    %17 = arith.mulf %12, %12 : vector<16x64xf32>
    %18 = arith.mulf %13, %13 : vector<16x64xf32>
    %19 = arith.mulf %12, %13 : vector<16x64xf32>
    %20 = arith.subf %14, %17 : vector<16x64xf32>
    %21 = arith.subf %15, %18 : vector<16x64xf32>
    %22 = arith.subf %16, %19 : vector<16x64xf32>
    %cst_10 = arith.constant 2.000000e+00 : f32
    %23 = vector.broadcast %cst_10 : f32 to vector<16x64xf32>
    %24 = arith.mulf %23, %19 : vector<16x64xf32>
    %cst_11 = arith.constant 9.99999974E-5 : f32
    %25 = vector.broadcast %cst_11 : f32 to vector<16x64xf32>
    %26 = arith.addf %24, %25 : vector<16x64xf32>
    %cst_12 = arith.constant 2.000000e+00 : f32
    %27 = vector.broadcast %cst_12 : f32 to vector<16x64xf32>
    %28 = arith.mulf %27, %22 : vector<16x64xf32>
    %cst_13 = arith.constant 8.99999984E-4 : f32
    %29 = vector.broadcast %cst_13 : f32 to vector<16x64xf32>
    %30 = arith.addf %28, %29 : vector<16x64xf32>
    %31 = arith.mulf %26, %30 : vector<16x64xf32>
    %32 = arith.addf %17, %18 : vector<16x64xf32>
    %cst_14 = arith.constant 9.99999974E-5 : f32
    %33 = vector.broadcast %cst_14 : f32 to vector<16x64xf32>
    %34 = arith.addf %32, %33 : vector<16x64xf32>
    %35 = arith.addf %20, %21 : vector<16x64xf32>
    %cst_15 = arith.constant 8.99999984E-4 : f32
    %36 = vector.broadcast %cst_15 : f32 to vector<16x64xf32>
    %37 = arith.addf %35, %36 : vector<16x64xf32>
    %38 = arith.mulf %34, %37 : vector<16x64xf32>
    %39 = tpu.reciprocal %38 : vector<16x64xf32> -> vector<16x64xf32>
    %40 = arith.mulf %31, %39 : vector<16x64xf32>
    %41 = vector.shape_cast %40 : vector<16x64xf32> to vector<1x16x64xf32>
    %cst_16 = arith.constant dense<0.000000e+00> : vector<1xf32>
    %42 = vector.multi_reduction <add>, %41, %cst_16 [1, 2] : vector<1x16x64xf32> to vector<1xf32>
    %43 = vector.shape_cast %42 : vector<1xf32> to vector<1x1x1xf32>
    %44 = vector.extract %43[0, 0, 0] : f32 from vector<1x1x1xf32>
    %45 = vector.broadcast %44 : f32 to vector<8x128xf32>
    %c0_17 = arith.constant 0 : index
    %c0_18 = arith.constant 0 : index
    %c0_19 = arith.constant 0 : index
    %46 = vector.load %arg5[%c0_17, %c0_18, %c0_19] : memref<1x8x128xf32, #tpu.memory_space<vmem>>, vector<1x8x128xf32>
    %47 = vector.shape_cast %46 : vector<1x8x128xf32> to vector<8x128xf32>
    %48 = vector.shape_cast %45 : vector<8x128xf32> to vector<1x8x128xf32>
    tpu.vector_store %arg5[%c0_17, %c0_18, %c0_19], %48 {strides = array<i32>} : memref<1x8x128xf32, #tpu.memory_space<vmem>>, vector<1x8x128xf32>,
    return
  }
  func.func @transform_0(%arg0: i32) -> (i32, i32, i32) {
    %c0_i32 = arith.constant 0 : i32
    %c0_i32_0 = arith.constant 0 : i32
    %c0_i32_1 = arith.constant 0 : i32
    return %arg0, %c0_i32, %c0_i32_0 : i32, i32, i32
  }
  func.func @transform_1(%arg0: i32) -> (i32, i32, i32) {
    %c0_i32 = arith.constant 0 : i32
    %c0_i32_0 = arith.constant 0 : i32
    %c0_i32_1 = arith.constant 0 : i32
    return %arg0, %c0_i32, %c0_i32_0 : i32, i32, i32
  }
  func.func @transform_2(%arg0: i32) -> (i32, i32) {
    %c0_i32 = arith.constant 0 : i32
    %c0_i32_0 = arith.constant 0 : i32
    %c0_i32_1 = arith.constant 0 : i32
    return %c0_i32, %c0_i32_0 : i32, i32
  }
  func.func @transform_3(%arg0: i32) -> (i32, i32) {
    %c0_i32 = arith.constant 0 : i32
    %c0_i32_0 = arith.constant 0 : i32
    %c0_i32_1 = arith.constant 0 : i32
    return %c0_i32, %c0_i32_0 : i32, i32
  }
  func.func @transform_4(%arg0: i32) -> (i32, i32, i32) {
    %c0_i32 = arith.constant 0 : i32
    %c0_i32_0 = arith.constant 0 : i32
    %c0_i32_1 = arith.constant 0 : i32
    return %arg0, %c0_i32, %c0_i32_0 : i32, i32, i32
  }
}

</mosaic_0001>

<llo_original>
// kernel: ssim.1
$region0: #{ssim.1}
  #allocation0 [shape = 'u32[]', space=smem, size = 0x4, offset = 0x4, fixed_abs, tag = 'smem constant byte address 0x4 - core index']
  #allocation1 [shape = 'u32[144,128]{1,0:T(1,128)}', space=vmem, size = 0x12000, scoped, tag = 'internal scratch']
  %s0 = inlined_call_operand.vmem [shape: f32[2,16,64], index: 0, kind: input, shape index: {}]
  %s1 = inlined_call_operand.vmem [shape: f32[2,16,64], index: 1, kind: input, shape index: {}]
  %s2 = inlined_call_operand.vmem [shape: f32[16,16], index: 2, kind: input, shape index: {}]
  %s3 = inlined_call_operand.vmem [shape: f32[320,320], index: 3, kind: input, shape index: {}]
  %s4 = inlined_call_operand.vmem [shape: f32[2,8,128], index: 4, kind: output, shape index: {}]
  %s5 = sld [smem:[#allocation0]]
  $region49: #{ssim.1} parent=0
    _
  %s7 = ssub.s32 1, %s5
  %s8 = scalar_select 0, %s7, %s5
  loop: start=0, step=1, limit=4
  $region2: #{ssim.1} parent=0 // loop_pre_header
    _
  $region3: #{ssim.1} parent=0 // loop_header
    %s10 = sphi 0, %s14
    %p11 = scmp.ge.s32.totalorder %s10, 4
    %s20 = sphi 0, %s22
    %s23 = sphi 0, %s20
    %s24 = sphi 0, %s23
    %s40 = sphi 0, %s24
    %s46 = sphi 0, %s48
    %s49 = sphi 0, %s46
    %s50 = sphi 0, %s49
    %s66 = sphi 0, %s50
    %s70 = sphi 0, %s70
    %s72 = sphi 0, %s70
    %s73 = sphi 0, %s72
    %s87 = sphi 0, %s73
    %s91 = sphi 0, %s91
    %s93 = sphi 0, %s91
    %s94 = sphi 0, %s93
    %s108 = sphi 0, %s94
    %s114 = sphi 0, %s116
    %s117 = sphi 0, %s114
    %s118 = sphi 0, %s117
    %s134 = sphi 0, %s118
  $region4: #{ssim.1} parent=0 // loop_header_branch
    %13 = sbr.rel (%p11) target = $region8
  $region5: #{ssim.1} parent=0 // loop_body
    %s15 = ssub.s32 %s10, 1
    %s16 = ssub.s32 %s10, 2
    %s17 = sadd.s32 %s10, 1
    %s18 = ssub.s32 %s10, %s17
    %p19 = scmp.eq.s32.totalorder %s18, 0
    %s21 = sadd.s32 %s20, 1
    %s22 = scalar_select %p19, %s20, %s21
    %p25 = pneg %p19
    %p26 = scmp.eq.s32.totalorder %s10, 1
    %p27 = por %p25, %p26
    %p28 = scmp.ne.s32.totalorder %s20, %s23
    %p29 = scmp.eq.s32.totalorder %s10, 0
    %p30 = por %p28, %p29
    %p31 = scmp.ne.s32.totalorder %s20, %s23
    %p32 = scmp.eq.s32.totalorder %s15, 1
    %p33 = por %p31, %p32
    %p34 = scmp.ne.s32.totalorder %s23, %s24
    %p35 = scmp.eq.s32.totalorder %s15, 0
    %p36 = por %p34, %p35
    %p37 = scmp.ne.s32.totalorder %s23, %s24
    %p38 = scmp.eq.s32.totalorder %s16, 1
    %p39 = por %p37, %p38
    %p41 = scmp.ne.s32.totalorder %s24, %s40
    %p42 = scmp.eq.s32.totalorder %s16, 0
    %p43 = por %p41, %p42
    %s44 = ssub.s32 %s10, %s17
    %p45 = scmp.eq.s32.totalorder %s44, 0
    %s47 = sadd.s32 %s46, 1
    %s48 = scalar_select %p45, %s46, %s47
    %p51 = pneg %p45
    %p52 = scmp.eq.s32.totalorder %s10, 1
    %p53 = por %p51, %p52
    %p54 = scmp.ne.s32.totalorder %s46, %s49
    %p55 = scmp.eq.s32.totalorder %s10, 0
    %p56 = por %p54, %p55
    %p57 = scmp.ne.s32.totalorder %s46, %s49
    %p58 = scmp.eq.s32.totalorder %s15, 1
    %p59 = por %p57, %p58
    %p60 = scmp.ne.s32.totalorder %s49, %s50
    %p61 = scmp.eq.s32.totalorder %s15, 0
    %p62 = por %p60, %p61
    %p63 = scmp.ne.s32.totalorder %s49, %s50
    %p64 = scmp.eq.s32.totalorder %s16, 1
    %p65 = por %p63, %p64
    %p67 = scmp.ne.s32.totalorder %s50, %s66
    %p68 = scmp.eq.s32.totalorder %s16, 0
    %p69 = por %p67, %p68
    %s71 = sadd.s32 %s70, 1
    %p74 = scmp.eq.s32.totalorder %s10, 1
    %p75 = scmp.ne.s32.totalorder %s70, %s72
    %p76 = scmp.eq.s32.totalorder %s10, 0
    %p77 = por %p75, %p76
    %p78 = scmp.ne.s32.totalorder %s70, %s72
    %p79 = scmp.eq.s32.totalorder %s15, 1
    %p80 = por %p78, %p79
    %p81 = scmp.ne.s32.totalorder %s72, %s73
    %p82 = scmp.eq.s32.totalorder %s15, 0
    %p83 = por %p81, %p82
    %p84 = scmp.ne.s32.totalorder %s72, %s73
    %p85 = scmp.eq.s32.totalorder %s16, 1
    %p86 = por %p84, %p85
    %p88 = scmp.ne.s32.totalorder %s73, %s87
    %p89 = scmp.eq.s32.totalorder %s16, 0
    %p90 = por %p88, %p89
    %s92 = sadd.s32 %s91, 1
    %p95 = scmp.eq.s32.totalorder %s10, 1
    %p96 = scmp.ne.s32.totalorder %s91, %s93
    %p97 = scmp.eq.s32.totalorder %s10, 0
    %p98 = por %p96, %p97
    %p99 = scmp.ne.s32.totalorder %s91, %s93
    %p100 = scmp.eq.s32.totalorder %s15, 1
    %p101 = por %p99, %p100
    %p102 = scmp.ne.s32.totalorder %s93, %s94
    %p103 = scmp.eq.s32.totalorder %s15, 0
    %p104 = por %p102, %p103
    %p105 = scmp.ne.s32.totalorder %s93, %s94
    %p106 = scmp.eq.s32.totalorder %s16, 1
    %p107 = por %p105, %p106
    %p109 = scmp.ne.s32.totalorder %s94, %s108
    %p110 = scmp.eq.s32.totalorder %s16, 0
    %p111 = por %p109, %p110
    %s112 = ssub.s32 %s10, %s17
    %p113 = scmp.eq.s32.totalorder %s112, 0
    %s115 = sadd.s32 %s114, 1
    %s116 = scalar_select %p113, %s114, %s115
    %p119 = pneg %p113
    %p120 = scmp.eq.s32.totalorder %s10, 1
    %p121 = por %p119, %p120
    %p122 = scmp.ne.s32.totalorder %s114, %s117
    %p123 = scmp.eq.s32.totalorder %s10, 0
    %p124 = por %p122, %p123
    %p125 = scmp.ne.s32.totalorder %s114, %s117
    %p126 = scmp.eq.s32.totalorder %s15, 1
    %p127 = por %p125, %p126
    %p128 = scmp.ne.s32.totalorder %s117, %s118
    %p129 = scmp.eq.s32.totalorder %s15, 0
    %p130 = por %p128, %p129
    %p131 = scmp.ne.s32.totalorder %s117, %s118
    %p132 = scmp.eq.s32.totalorder %s16, 1
    %p133 = por %p131, %p132
    %p135 = scmp.ne.s32.totalorder %s118, %s134
    %p136 = scmp.eq.s32.totalorder %s16, 0
    %p137 = por %p135, %p136
    %p138 = scmp.le.s32.totalorder 1, %s10
    %p139 = scmp.lt.s32.totalorder %s10, 3
    %p140 = pnand %p138, %p139
    %p141 = pneg %p140
    // Predicated region
    $region9: #{ssim.1} parent=5 // pred_check
      _
    $region10: #{ssim.1} parent=5 // pred_check_branch
      %143 = sbr.rel (%p140) target = $region12
    $region11: #{ssim.1} parent=5 // pred_region
      %s144 = ssub.s32 %s10, 1
      // Predicated region
      $region13: #{ssim.1} parent=11 // pred_check
        %p145 = pneg %p83
      $region14: #{ssim.1} parent=11 // pred_check_branch
        %147 = sbr.rel (%p145) target = $region16
      $region15: #{ssim.1} parent=11 // pred_region
        _
      $region16: #{ssim.1} parent=11 // pred_fallthru
        _
      // Predicated region
      $region17: #{ssim.1} parent=11 // pred_check
        %p148 = pneg %p104
      $region18: #{ssim.1} parent=11 // pred_check_branch
        %150 = sbr.rel (%p148) target = $region20
      $region19: #{ssim.1} parent=11 // pred_region
        _
      $region20: #{ssim.1} parent=11 // pred_fallthru
        _
    $region12: #{ssim.1} parent=5 // pred_fallthru
      _
    %p151 = scmp.lt.s32.totalorder %s10, 2
    // Predicated region
    $region21: #{ssim.1} parent=5 // pred_check
      %p152 = pneg %p151
    $region22: #{ssim.1} parent=5 // pred_check_branch
      %154 = sbr.rel (%p152) target = $region24
    $region23: #{ssim.1} parent=5 // pred_region
      // Predicated region
      $region25: #{ssim.1} parent=23 // pred_check
        %p155 = pneg %p30
      $region26: #{ssim.1} parent=23 // pred_check_branch
        %157 = sbr.rel (%p155) target = $region28
      $region27: #{ssim.1} parent=23 // pred_region
        %p158 = scmp.lt.s32.totalorder %s10, 1
        %s159 = scalar_select %p158, %s10, 1
        %s160 = smul.addr %s159, 2
        %s161 = smul.addr %s160, 8
        %s162 = scalar_lea.vmem %s0, %s161
      $region28: #{ssim.1} parent=23 // pred_fallthru
        _
      // Predicated region
      $region29: #{ssim.1} parent=23 // pred_check
        %p163 = pneg %p56
      $region30: #{ssim.1} parent=23 // pred_check_branch
        %165 = sbr.rel (%p163) target = $region32
      $region31: #{ssim.1} parent=23 // pred_region
        %p166 = scmp.lt.s32.totalorder %s10, 1
        %s167 = scalar_select %p166, %s10, 1
        %s168 = smul.addr %s167, 2
        %s169 = smul.addr %s168, 8
        %s170 = scalar_lea.vmem %s1, %s169
      $region32: #{ssim.1} parent=23 // pred_fallthru
        _
    $region24: #{ssim.1} parent=5 // pred_fallthru
      _
    %p171 = scmp.le.s32.totalorder 1, %s10
    %p172 = scmp.lt.s32.totalorder %s10, 3
    %p173 = pnand %p171, %p172
    %p174 = pneg %p173
    // Predicated region
    $region33: #{ssim.1} parent=5 // pred_check
      _
    $region34: #{ssim.1} parent=5 // pred_check_branch
      %176 = sbr.rel (%p173) target = $region36
    $region35: #{ssim.1} parent=5 // pred_region
      %s177 = ssub.s32 %s10, 1
      %p178 = scmp.lt.s32.totalorder %s15, 1
      %s179 = scalar_select %p178, %s15, 1
      %s180 = smul.addr %s179, 2
      %s181 = smul.addr %s180, 8
      %s182 = scalar_lea.vmem %s0, %s181
      %p183 = pneg %p36
      %p184 = pneg %p33
      %p185 = scmp.lt.s32.totalorder %s15, 1
      %s186 = scalar_select %p185, %s15, 1
      %s187 = smul.addr %s186, 2
      %s188 = smul.addr %s187, 8
      %s189 = scalar_lea.vmem %s1, %s188
      %p190 = pneg %p62
      %p191 = pneg %p59
      %p192 = pneg %p83
      %p193 = pneg %p80
      %p194 = pneg %p104
      %p195 = pneg %p101
      %p196 = pneg %p130
      %p197 = pneg %p127
      %p198 = scmp.lt.s32.totalorder %s15, 1
      %s199 = scalar_select %p198, %s15, 1
      %s200 = smul.addr %s199, 8
      %s201 = scalar_lea.vmem %s4, %s200
      %p202 = scmp.lt.s32.totalorder %s15, 1
      %s203 = scalar_select %p202, %s15, 1
      %s204 = smul.addr %s203, 2
      %s205 = smul.addr %s204, 8
      %s206 = scalar_lea.vmem %s0, %s205
      %p207 = scmp.lt.s32.totalorder %s15, 1
      %s208 = scalar_select %p207, %s15, 1
      %s209 = smul.addr %s208, 2
      %s210 = smul.addr %s209, 8
      %s211 = scalar_lea.vmem %s1, %s210
      %p212 = scmp.lt.s32.totalorder %s15, 1
      %s213 = scalar_select %p212, %s15, 1
      %s214 = smul.addr %s213, 8
      %s215 = scalar_lea.vmem %s4, %s214
      %v216 = vld [vmem:[%s206] sm:$0xff]
      %v217 = vld [vmem:[%s206 + $0x8] sm:$0xff]
      %v218 = vld [vmem:[%s211] sm:$0xff]
      %v219 = vld [vmem:[%s211 + $0x8] sm:$0xff]
      %v220 = vld [vmem:[%s2] sm:$0xff]
      %v221 = vld [vmem:[%s2 + $0x8] sm:$0xff]
      %v222 = vld [vmem:[%s3] sm:$0xff]
      %v223 = vld [vmem:[%s3 + $0x8] sm:$0xff]
      %v224 = vld [vmem:[%s3 + $0x10] sm:$0xff]
      %v225 = vld [vmem:[%s3 + $0x18] sm:$0xff]
      %v226 = vld [vmem:[%s3 + $0x20] sm:$0xff]
      %v227 = vld [vmem:[%s3 + $0x28] sm:$0xff]
      %v228 = vld [vmem:[%s3 + $0x30] sm:$0xff]
      %v229 = vld [vmem:[%s3 + $0x38] sm:$0xff]
      %v230 = vld [vmem:[%s3 + $0x40] sm:$0xff]
      %v231 = vld [vmem:[%s3 + $0x48] sm:$0xff]
      %v232 = vld [vmem:[%s3 + $0x50] sm:$0xff]
      %v233 = vld [vmem:[%s3 + $0x58] sm:$0xff]
      %v234 = vld [vmem:[%s3 + $0x60] sm:$0xff]
      %v235 = vld [vmem:[%s3 + $0x68] sm:$0xff]
      %v236 = vld [vmem:[%s3 + $0x70] sm:$0xff]
      %v237 = vld [vmem:[%s3 + $0x78] sm:$0xff]
      %v238 = vld [vmem:[%s3 + $0x80] sm:$0xff]
      %v239 = vld [vmem:[%s3 + $0x88] sm:$0xff]
      %v240 = vld [vmem:[%s3 + $0x90] sm:$0xff]
      %v241 = vld [vmem:[%s3 + $0x98] sm:$0xff]
      %v242 = vld [vmem:[%s3 + $0xa0] sm:$0xff]
      %v243 = vld [vmem:[%s3 + $0xa8] sm:$0xff]
      %v244 = vld [vmem:[%s3 + $0xb0] sm:$0xff]
      %v245 = vld [vmem:[%s3 + $0xb8] sm:$0xff]
      %v246 = vld [vmem:[%s3 + $0xc0] sm:$0xff]
      %v247 = vld [vmem:[%s3 + $0xc8] sm:$0xff]
      %v248 = vld [vmem:[%s3 + $0xd0] sm:$0xff]
      %v249 = vld [vmem:[%s3 + $0xd8] sm:$0xff]
      %v250 = vld [vmem:[%s3 + $0xe0] sm:$0xff]
      %v251 = vld [vmem:[%s3 + $0xe8] sm:$0xff]
      %v252 = vld [vmem:[%s3 + $0xf0] sm:$0xff]
      %v253 = vld [vmem:[%s3 + $0xf8] sm:$0xff]
      %v254 = vld [vmem:[%s3 + $0x100] sm:$0xff]
      %v255 = vld [vmem:[%s3 + $0x108] sm:$0xff]
      %v256 = vld [vmem:[%s3 + $0x110] sm:$0xff]
      %v257 = vld [vmem:[%s3 + $0x118] sm:$0xff]
      %v258 = vld [vmem:[%s3 + $0x120] sm:$0xff]
      %v259 = vld [vmem:[%s3 + $0x128] sm:$0xff]
      %v260 = vld [vmem:[%s3 + $0x130] sm:$0xff]
      %v261 = vld [vmem:[%s3 + $0x138] sm:$0xff]
      %v262 = vld [vmem:[%s3 + $0x140] sm:$0xff]
      %v263 = vld [vmem:[%s3 + $0x148] sm:$0xff]
      %v264 = vld [vmem:[%s3 + $0x150] sm:$0xff]
      %v265 = vld [vmem:[%s3 + $0x158] sm:$0xff]
      %v266 = vld [vmem:[%s3 + $0x160] sm:$0xff]
      %v267 = vld [vmem:[%s3 + $0x168] sm:$0xff]
      %v268 = vld [vmem:[%s3 + $0x170] sm:$0xff]
      %v269 = vld [vmem:[%s3 + $0x178] sm:$0xff]
      %v270 = vld [vmem:[%s3 + $0x180] sm:$0xff]
      %v271 = vld [vmem:[%s3 + $0x188] sm:$0xff]
      %v272 = vld [vmem:[%s3 + $0x190] sm:$0xff]
      %v273 = vld [vmem:[%s3 + $0x198] sm:$0xff]
      %v274 = vld [vmem:[%s3 + $0x1a0] sm:$0xff]
      %v275 = vld [vmem:[%s3 + $0x1a8] sm:$0xff]
      %v276 = vld [vmem:[%s3 + $0x1b0] sm:$0xff]
      %v277 = vld [vmem:[%s3 + $0x1b8] sm:$0xff]
      %v278 = vld [vmem:[%s3 + $0x1c0] sm:$0xff]
      %v279 = vld [vmem:[%s3 + $0x1c8] sm:$0xff]
      %v280 = vld [vmem:[%s3 + $0x1d0] sm:$0xff]
      %v281 = vld [vmem:[%s3 + $0x1d8] sm:$0xff]
      %v282 = vld [vmem:[%s3 + $0x1e0] sm:$0xff]
      %v283 = vld [vmem:[%s3 + $0x1e8] sm:$0xff]
      %v284 = vld [vmem:[%s3 + $0x1f0] sm:$0xff]
      %v285 = vld [vmem:[%s3 + $0x1f8] sm:$0xff]
      %v286 = vld [vmem:[%s3 + $0x200] sm:$0xff]
      %v287 = vld [vmem:[%s3 + $0x208] sm:$0xff]
      %v288 = vld [vmem:[%s3 + $0x210] sm:$0xff]
      %v289 = vld [vmem:[%s3 + $0x218] sm:$0xff]
      %v290 = vld [vmem:[%s3 + $0x220] sm:$0xff]
      %v291 = vld [vmem:[%s3 + $0x228] sm:$0xff]
      %v292 = vld [vmem:[%s3 + $0x230] sm:$0xff]
      %v293 = vld [vmem:[%s3 + $0x238] sm:$0xff]
      %v294 = vld [vmem:[%s3 + $0x240] sm:$0xff]
      %v295 = vld [vmem:[%s3 + $0x248] sm:$0xff]
      %v296 = vld [vmem:[%s3 + $0x250] sm:$0xff]
      %v297 = vld [vmem:[%s3 + $0x258] sm:$0xff]
      %v298 = vld [vmem:[%s3 + $0x260] sm:$0xff]
      %v299 = vld [vmem:[%s3 + $0x268] sm:$0xff]
      %v300 = vld [vmem:[%s3 + $0x270] sm:$0xff]
      %v301 = vld [vmem:[%s3 + $0x278] sm:$0xff]
      %v302 = vld [vmem:[%s3 + $0x280] sm:$0xff]
      %v303 = vld [vmem:[%s3 + $0x288] sm:$0xff]
      %v304 = vld [vmem:[%s3 + $0x290] sm:$0xff]
      %v305 = vld [vmem:[%s3 + $0x298] sm:$0xff]
      %v306 = vld [vmem:[%s3 + $0x2a0] sm:$0xff]
      %v307 = vld [vmem:[%s3 + $0x2a8] sm:$0xff]
      %v308 = vld [vmem:[%s3 + $0x2b0] sm:$0xff]
      %v309 = vld [vmem:[%s3 + $0x2b8] sm:$0xff]
      %v310 = vld [vmem:[%s3 + $0x2c0] sm:$0xff]
      %v311 = vld [vmem:[%s3 + $0x2c8] sm:$0xff]
      %v312 = vld [vmem:[%s3 + $0x2d0] sm:$0xff]
      %v313 = vld [vmem:[%s3 + $0x2d8] sm:$0xff]
      %v314 = vld [vmem:[%s3 + $0x2e0] sm:$0xff]
      %v315 = vld [vmem:[%s3 + $0x2e8] sm:$0xff]
      %v316 = vld [vmem:[%s3 + $0x2f0] sm:$0xff]
      %v317 = vld [vmem:[%s3 + $0x2f8] sm:$0xff]
      %v318 = vld [vmem:[%s3 + $0x300] sm:$0xff]
      %v319 = vld [vmem:[%s3 + $0x308] sm:$0xff]
      %v320 = vld [vmem:[%s3 + $0x310] sm:$0xff]
      %v321 = vld [vmem:[%s3 + $0x318] sm:$0xff]
      %v322 = vld [vmem:[%s3 + $0x320] sm:$0xff]
      %v323 = vld [vmem:[%s3 + $0x328] sm:$0xff]
      %v324 = vld [vmem:[%s3 + $0x330] sm:$0xff]
      %v325 = vld [vmem:[%s3 + $0x338] sm:$0xff]
      %v326 = vld [vmem:[%s3 + $0x340] sm:$0xff]
      %v327 = vld [vmem:[%s3 + $0x348] sm:$0xff]
      %v328 = vld [vmem:[%s3 + $0x350] sm:$0xff]
      %v329 = vld [vmem:[%s3 + $0x358] sm:$0xff]
      %v330 = vld [vmem:[%s3 + $0x360] sm:$0xff]
      %v331 = vld [vmem:[%s3 + $0x368] sm:$0xff]
      %v332 = vld [vmem:[%s3 + $0x370] sm:$0xff]
      %v333 = vld [vmem:[%s3 + $0x378] sm:$0xff]
      %v334 = vld [vmem:[%s3 + $0x380] sm:$0xff]
      %v335 = vld [vmem:[%s3 + $0x388] sm:$0xff]
      %v336 = vld [vmem:[%s3 + $0x390] sm:$0xff]
      %v337 = vld [vmem:[%s3 + $0x398] sm:$0xff]
      %v338 = vld [vmem:[%s3 + $0x3a0] sm:$0xff]
      %v339 = vld [vmem:[%s3 + $0x3a8] sm:$0xff]
      %v340 = vld [vmem:[%s3 + $0x3b0] sm:$0xff]
      %v341 = vld [vmem:[%s3 + $0x3b8] sm:$0xff]
      %v342 = vmul.f32 %v216, %v216
      %v343 = vmul.f32 %v217, %v217
      %v344 = vmul.f32 %v218, %v218
      %v345 = vmul.f32 %v219, %v219
      %v346 = vmul.f32 %v216, %v218
      %v347 = vmul.f32 %v217, %v219
      %350 = vrot.lane.b32.xlu0 %v218, 64
      %v351 = vpop.permute.xlu0 %350
      %352 = vrot.lane.b32.xlu0 %v219, 64
      %v353 = vpop.permute.xlu0 %352
      %358 = vrot.lane.b32.xlu0 %v344, 64
      %v359 = vpop.permute.xlu0 %358
      %360 = vrot.lane.b32.xlu0 %v345, 64
      %v361 = vpop.permute.xlu0 %360
      %vm364 = vcmask 523264
      %v365 = vsel %vm364, %v216, %v351
      %v366 = vsel %vm364, %v217, %v353
      %v367 = vsel %vm364, %v342, %v359
      %v368 = vsel %vm364, %v343, %v361
      %vm369 = vcmask 130048
      %v371 = vsel %vm369, %v220, 0
      %v374 = vsel %vm369, %v221, 0
      %376 = vmatprep.subr.mxu0 %v367
      %377 = vmatpush1.msra.mxu0 %v365
      %378 = vmatprep.subr.mxu0 %v368
      %379 = vmatpush1.msra.mxu0 %v366
      %380 = vmatprep.subr.mxu0 0.0
      %381 = vmatpush1.msra.mxu0 0.0
      %382 = vmatprep.subr.mxu0 0.0
      %383 = vmatpush1.msra.mxu0 0.0
      %384 = vmatprep.subr.mxu0 0.0
      %385 = vmatpush1.msra.mxu0 0.0
      %386 = vmatprep.subr.mxu0 0.0
      %387 = vmatpush1.msra.mxu0 0.0
      %388 = vmatprep.subr.mxu0 0.0
      %389 = vmatpush1.msra.mxu0 0.0
      %390 = vmatprep.subr.mxu0 0.0
      %391 = vmatpush1.msra.mxu0 0.0
      %392 = vmatprep.subr.mxu0 0.0
      %393 = vmatpush1.msra.mxu0 0.0
      %394 = vmatprep.subr.mxu0 0.0
      %395 = vmatpush1.msra.mxu0 0.0
      %396 = vmatprep.subr.mxu0 0.0
      %397 = vmatpush1.msra.mxu0 0.0
      %398 = vmatprep.subr.mxu0 0.0
      %399 = vmatpush1.msra.mxu0 0.0
      %400 = vmatprep.subr.mxu0 0.0
      %401 = vmatpush1.msra.mxu0 0.0
      %402 = vmatprep.subr.mxu0 0.0
      %403 = vmatpush1.msra.mxu0 0.0
      %404 = vmatprep.subr.mxu0 0.0
      %405 = vmatpush1.msra.mxu0 0.0
      %406 = vmatprep.subr.mxu0 0.0
      %407 = vmatpush1.msra.mxu0 0.0
      %408 = vmatprep.subr.mxu0 0.0
      %409 = vmatpush1.msra.mxu0 0.0
      %410 = vmatprep.subr.mxu0 0.0
      %411 = vmatpush1.msra.mxu0 0.0
      %412 = vmatprep.subr.mxu0 0.0
      %413 = vmatpush1.msra.mxu0 0.0
      %414 = vmatprep.subr.mxu0 0.0
      %415 = vmatpush1.msra.mxu0 0.0
      %416 = vmatprep.subr.mxu0 0.0
      %417 = vmatpush1.msra.mxu0 0.0
      %418 = vmatprep.subr.mxu0 0.0
      %419 = vmatpush1.msra.mxu0 0.0
      %420 = vmatprep.subr.mxu0 0.0
      %421 = vmatpush1.msra.mxu0 0.0
      %422 = vmatprep.subr.mxu0 0.0
      %423 = vmatpush1.msra.mxu0 0.0
      %424 = vmatprep.subr.mxu0 0.0
      %425 = vmatpush1.msra.mxu0 0.0
      %426 = vmatprep.subr.mxu0 0.0
      %427 = vmatpush1.msra.mxu0 0.0
      %428 = vmatprep.subr.mxu0 0.0
      %429 = vmatpush1.msra.mxu0 0.0
      %430 = vmatprep.subr.mxu0 0.0
      %431 = vmatpush1.msra.mxu0 0.0
      %432 = vmatprep.subr.mxu0 0.0
      %433 = vmatpush1.msra.mxu0 0.0
      %434 = vmatprep.subr.mxu0 0.0
      %435 = vmatpush1.msra.mxu0 0.0
      %436 = vmatprep.subr.mxu0 0.0
      %437 = vmatpush1.msra.mxu0 0.0
      %438 = vmatprep.subr.mxu0 0.0
      %439 = vmatpush1.msra.mxu0 0.0
      %440 = vmatprep.mubr.f32.mxu0 0.0
      %441 = vmatmul.mubr.f32.gmra.mrb[0].mxu0 %v371
      %v442 = vpop.f32.mrb[0].mxu0
      %v443 = vadd.f32 0.0, %v442
      %v444 = vpop.f32.mrb[0].mxu0
      %v445 = vadd.f32 0.0, %v444
      %446 = vmatprep.mubr.f32.mxu0 0.0
      %447 = vmatmul.mubr.f32.gmra.mrb[0].mxu0 %v374
      %v448 = vpop.f32.mrb[0].mxu0
      %v449 = vadd.f32 0.0, %v448
      %v450 = vpop.f32.mrb[0].mxu0
      %v451 = vadd.f32 0.0, %v450
      %452 = vdwg.mxu0
      %453 = vmatprep.subr.mxu0 0.0
      %454 = vmatpush1.msra.mxu0 %v346
      %455 = vmatprep.subr.mxu0 0.0
      %456 = vmatpush1.msra.mxu0 %v347
      %457 = vmatprep.subr.mxu0 0.0
      %458 = vmatpush1.msra.mxu0 0.0
      %459 = vmatprep.subr.mxu0 0.0
      %460 = vmatpush1.msra.mxu0 0.0
      %461 = vmatprep.subr.mxu0 0.0
      %462 = vmatpush1.msra.mxu0 0.0
      %463 = vmatprep.subr.mxu0 0.0
      %464 = vmatpush1.msra.mxu0 0.0
      %465 = vmatprep.subr.mxu0 0.0
      %466 = vmatpush1.msra.mxu0 0.0
      %467 = vmatprep.subr.mxu0 0.0
      %468 = vmatpush1.msra.mxu0 0.0
      %469 = vmatprep.subr.mxu0 0.0
      %470 = vmatpush1.msra.mxu0 0.0
      %471 = vmatprep.subr.mxu0 0.0
      %472 = vmatpush1.msra.mxu0 0.0
      %473 = vmatprep.subr.mxu0 0.0
      %474 = vmatpush1.msra.mxu0 0.0
      %475 = vmatprep.subr.mxu0 0.0
      %476 = vmatpush1.msra.mxu0 0.0
      %477 = vmatprep.subr.mxu0 0.0
      %478 = vmatpush1.msra.mxu0 0.0
      %479 = vmatprep.subr.mxu0 0.0
      %480 = vmatpush1.msra.mxu0 0.0
      %481 = vmatprep.subr.mxu0 0.0
      %482 = vmatpush1.msra.mxu0 0.0
      %483 = vmatprep.subr.mxu0 0.0
      %484 = vmatpush1.msra.mxu0 0.0
      %485 = vmatprep.subr.mxu0 0.0
      %486 = vmatpush1.msra.mxu0 0.0
      %487 = vmatprep.subr.mxu0 0.0
      %488 = vmatpush1.msra.mxu0 0.0
      %489 = vmatprep.subr.mxu0 0.0
      %490 = vmatpush1.msra.mxu0 0.0
      %491 = vmatprep.subr.mxu0 0.0
      %492 = vmatpush1.msra.mxu0 0.0
      %493 = vmatprep.subr.mxu0 0.0
      %494 = vmatpush1.msra.mxu0 0.0
      %495 = vmatprep.subr.mxu0 0.0
      %496 = vmatpush1.msra.mxu0 0.0
      %497 = vmatprep.subr.mxu0 0.0
      %498 = vmatpush1.msra.mxu0 0.0
      %499 = vmatprep.subr.mxu0 0.0
      %500 = vmatpush1.msra.mxu0 0.0
      %501 = vmatprep.subr.mxu0 0.0
      %502 = vmatpush1.msra.mxu0 0.0
      %503 = vmatprep.subr.mxu0 0.0
      %504 = vmatpush1.msra.mxu0 0.0
      %505 = vmatprep.subr.mxu0 0.0
      %506 = vmatpush1.msra.mxu0 0.0
      %507 = vmatprep.subr.mxu0 0.0
      %508 = vmatpush1.msra.mxu0 0.0
      %509 = vmatprep.subr.mxu0 0.0
      %510 = vmatpush1.msra.mxu0 0.0
      %511 = vmatprep.subr.mxu0 0.0
      %512 = vmatpush1.msra.mxu0 0.0
      %513 = vmatprep.subr.mxu0 0.0
      %514 = vmatpush1.msra.mxu0 0.0
      %515 = vmatprep.subr.mxu0 0.0
      %516 = vmatpush1.msra.mxu0 0.0
      %517 = vmatprep.mubr.f32.mxu0 0.0
      %518 = vmatmul.mubr.f32.gmra.mrb[0].mxu0 %v371
      %v519 = vpop.f32.mrb[0].mxu0
      %v520 = vadd.f32 0.0, %v519
      %v521 = vpop.f32.mrb[0].mxu0
      %522 = vmatprep.mubr.f32.mxu0 0.0
      %523 = vmatmul.mubr.f32.gmra.mrb[0].mxu0 %v374
      %v524 = vpop.f32.mrb[0].mxu0
      %v525 = vadd.f32 0.0, %v524
      %v526 = vpop.f32.mrb[0].mxu0
      %527 = vdwg.mxu0
      %v529 = vsel %vm364, %v520, 0
      %v532 = vsel %vm364, %v525, 0
      %534 = vmatprep.subr.mxu0 %v223
      %535 = vmatpush1.msra.mxu0 %v222
      %536 = vmatprep.subr.mxu0 %v226
      %537 = vmatpush1.msra.mxu0 %v225
      %538 = vmatprep.subr.mxu0 %v229
      %539 = vmatpush1.msra.mxu0 %v228
      %540 = vmatprep.subr.mxu0 %v232
      %541 = vmatpush1.msra.mxu0 %v231
      %542 = vmatprep.subr.mxu0 %v235
      %543 = vmatpush1.msra.mxu0 %v234
      %544 = vmatprep.subr.mxu0 %v238
      %545 = vmatpush1.msra.mxu0 %v237
      %546 = vmatprep.subr.mxu0 %v241
      %547 = vmatpush1.msra.mxu0 %v240
      %548 = vmatprep.subr.mxu0 %v244
      %549 = vmatpush1.msra.mxu0 %v243
      %550 = vmatprep.subr.mxu0 %v247
      %551 = vmatpush1.msra.mxu0 %v246
      %552 = vmatprep.subr.mxu0 %v250
      %553 = vmatpush1.msra.mxu0 %v249
      %554 = vmatprep.subr.mxu0 %v253
      %555 = vmatpush1.msra.mxu0 %v252
      %556 = vmatprep.subr.mxu0 %v256
      %557 = vmatpush1.msra.mxu0 %v255
      %558 = vmatprep.subr.mxu0 %v259
      %559 = vmatpush1.msra.mxu0 %v258
      %560 = vmatprep.subr.mxu0 %v262
      %561 = vmatpush1.msra.mxu0 %v261
      %562 = vmatprep.subr.mxu0 %v265
      %563 = vmatpush1.msra.mxu0 %v264
      %564 = vmatprep.subr.mxu0 %v268
      %565 = vmatpush1.msra.mxu0 %v267
      %566 = vmatprep.subr.mxu0 %v271
      %567 = vmatpush1.msra.mxu0 %v270
      %568 = vmatprep.subr.mxu0 %v274
      %569 = vmatpush1.msra.mxu0 %v273
      %570 = vmatprep.subr.mxu0 %v277
      %571 = vmatpush1.msra.mxu0 %v276
      %572 = vmatprep.subr.mxu0 %v280
      %573 = vmatpush1.msra.mxu0 %v279
      %574 = vmatprep.subr.mxu0 %v283
      %575 = vmatpush1.msra.mxu0 %v282
      %576 = vmatprep.subr.mxu0 %v286
      %577 = vmatpush1.msra.mxu0 %v285
      %578 = vmatprep.subr.mxu0 %v289
      %579 = vmatpush1.msra.mxu0 %v288
      %580 = vmatprep.subr.mxu0 %v292
      %581 = vmatpush1.msra.mxu0 %v291
      %582 = vmatprep.subr.mxu0 %v295
      %583 = vmatpush1.msra.mxu0 %v294
      %584 = vmatprep.subr.mxu0 %v298
      %585 = vmatpush1.msra.mxu0 %v297
      %586 = vmatprep.subr.mxu0 %v301
      %587 = vmatpush1.msra.mxu0 %v300
      %588 = vmatprep.subr.mxu0 %v304
      %589 = vmatpush1.msra.mxu0 %v303
      %590 = vmatprep.subr.mxu0 %v307
      %591 = vmatpush1.msra.mxu0 %v306
      %592 = vmatprep.subr.mxu0 %v310
      %593 = vmatpush1.msra.mxu0 %v309
      %594 = vmatprep.subr.mxu0 %v313
      %595 = vmatpush1.msra.mxu0 %v312
      %596 = vmatprep.subr.mxu0 %v316
      %597 = vmatpush1.msra.mxu0 %v315
      %598 = vmatprep.mubr.f32.mxu0 %v445
      %599 = vmatmul.mubr.f32.gmra.mrb[0].mxu0 %v443
      %v600 = vpop.f32.mrb[0].mxu0
      %v601 = vadd.f32 0.0, %v600
      %v602 = vpop.f32.mrb[0].mxu0
      %v603 = vadd.f32 0.0, %v602
      %604 = vmatprep.mubr.f32.mxu0 %v451
      %605 = vmatmul.mubr.f32.gmra.mrb[0].mxu0 %v449
      %v606 = vpop.f32.mrb[0].mxu0
      %v607 = vadd.f32 0.0, %v606
      %v608 = vpop.f32.mrb[0].mxu0
      %v609 = vadd.f32 0.0, %v608
      %610 = vdwg.mxu0
      %611 = vmatprep.subr.mxu0 %v319
      %612 = vmatpush1.msra.mxu0 %v318
      %613 = vmatprep.subr.mxu0 %v322
      %614 = vmatpush1.msra.mxu0 %v321
      %615 = vmatprep.subr.mxu0 %v325
      %616 = vmatpush1.msra.mxu0 %v324
      %617 = vmatprep.subr.mxu0 %v328
      %618 = vmatpush1.msra.mxu0 %v327
      %619 = vmatprep.subr.mxu0 %v331
      %620 = vmatpush1.msra.mxu0 %v330
      %621 = vmatprep.subr.mxu0 %v334
      %622 = vmatpush1.msra.mxu0 %v333
      %623 = vmatprep.subr.mxu0 %v337
      %624 = vmatpush1.msra.mxu0 %v336
      %625 = vmatprep.subr.mxu0 %v340
      %626 = vmatpush1.msra.mxu0 %v339
      %627 = vmatprep.subr.mxu0 0.0
      %628 = vmatpush1.msra.mxu0 0.0
      %629 = vmatprep.subr.mxu0 0.0
      %630 = vmatpush1.msra.mxu0 0.0
      %631 = vmatprep.subr.mxu0 0.0
      %632 = vmatpush1.msra.mxu0 0.0
      %633 = vmatprep.subr.mxu0 0.0
      %634 = vmatpush1.msra.mxu0 0.0
      %635 = vmatprep.subr.mxu0 0.0
      %636 = vmatpush1.msra.mxu0 0.0
      %637 = vmatprep.subr.mxu0 0.0
      %638 = vmatpush1.msra.mxu0 0.0
      %639 = vmatprep.subr.mxu0 0.0
      %640 = vmatpush1.msra.mxu0 0.0
      %641 = vmatprep.subr.mxu0 0.0
      %642 = vmatpush1.msra.mxu0 0.0
      %643 = vmatprep.subr.mxu0 0.0
      %644 = vmatpush1.msra.mxu0 0.0
      %645 = vmatprep.subr.mxu0 0.0
      %646 = vmatpush1.msra.mxu0 0.0
      %647 = vmatprep.subr.mxu0 0.0
      %648 = vmatpush1.msra.mxu0 0.0
      %649 = vmatprep.subr.mxu0 0.0
      %650 = vmatpush1.msra.mxu0 0.0
      %651 = vmatprep.subr.mxu0 0.0
      %652 = vmatpush1.msra.mxu0 0.0
      %653 = vmatprep.subr.mxu0 0.0
      %654 = vmatpush1.msra.mxu0 0.0
      %655 = vmatprep.subr.mxu0 0.0
      %656 = vmatpush1.msra.mxu0 0.0
      %657 = vmatprep.subr.mxu0 0.0
      %658 = vmatpush1.msra.mxu0 0.0
      %659 = vmatprep.subr.mxu0 0.0
      %660 = vmatpush1.msra.mxu0 0.0
      %661 = vmatprep.subr.mxu0 0.0
      %662 = vmatpush1.msra.mxu0 0.0
      %663 = vmatprep.subr.mxu0 0.0
      %664 = vmatpush1.msra.mxu0 0.0
      %665 = vmatprep.subr.mxu0 0.0
      %666 = vmatpush1.msra.mxu0 0.0
      %667 = vmatprep.subr.mxu0 0.0
      %668 = vmatpush1.msra.mxu0 0.0
      %669 = vmatprep.subr.mxu0 0.0
      %670 = vmatpush1.msra.mxu0 0.0
      %671 = vmatprep.subr.mxu0 0.0
      %672 = vmatpush1.msra.mxu0 0.0
      %673 = vmatprep.subr.mxu0 0.0
      %674 = vmatpush1.msra.mxu0 0.0
      %675 = vmatprep.mubr.f32.mxu0 0.0
      %676 = vmatmul.mubr.f32.gmra.mrb[0].mxu0 %v529
      %v677 = vpop.f32.mrb[0].mxu0
      %v678 = vadd.f32 %v601, %v677
      %v679 = vpop.f32.mrb[0].mxu0
      %v680 = vadd.f32 %v603, %v679
      %681 = vmatprep.mubr.f32.mxu0 0.0
      %682 = vmatmul.mubr.f32.gmra.mrb[0].mxu0 %v532
      %v683 = vpop.f32.mrb[0].mxu0
      %v684 = vadd.f32 %v607, %v683
      %v685 = vpop.f32.mrb[0].mxu0
      %v686 = vadd.f32 %v609, %v685
      %687 = vdwg.mxu0
      %688 = vmatprep.subr.mxu0 0.0
      %689 = vmatpush1.msra.mxu0 %v224
      %690 = vmatprep.subr.mxu0 0.0
      %691 = vmatpush1.msra.mxu0 %v227
      %692 = vmatprep.subr.mxu0 0.0
      %693 = vmatpush1.msra.mxu0 %v230
      %694 = vmatprep.subr.mxu0 0.0
      %695 = vmatpush1.msra.mxu0 %v233
      %696 = vmatprep.subr.mxu0 0.0
      %697 = vmatpush1.msra.mxu0 %v236
      %698 = vmatprep.subr.mxu0 0.0
      %699 = vmatpush1.msra.mxu0 %v239
      %700 = vmatprep.subr.mxu0 0.0
      %701 = vmatpush1.msra.mxu0 %v242
      %702 = vmatprep.subr.mxu0 0.0
      %703 = vmatpush1.msra.mxu0 %v245
      %704 = vmatprep.subr.mxu0 0.0
      %705 = vmatpush1.msra.mxu0 %v248
      %706 = vmatprep.subr.mxu0 0.0
      %707 = vmatpush1.msra.mxu0 %v251
      %708 = vmatprep.subr.mxu0 0.0
      %709 = vmatpush1.msra.mxu0 %v254
      %710 = vmatprep.subr.mxu0 0.0
      %711 = vmatpush1.msra.mxu0 %v257
      %712 = vmatprep.subr.mxu0 0.0
      %713 = vmatpush1.msra.mxu0 %v260
      %714 = vmatprep.subr.mxu0 0.0
      %715 = vmatpush1.msra.mxu0 %v263
      %716 = vmatprep.subr.mxu0 0.0
      %717 = vmatpush1.msra.mxu0 %v266
      %718 = vmatprep.subr.mxu0 0.0
      %719 = vmatpush1.msra.mxu0 %v269
      %720 = vmatprep.subr.mxu0 0.0
      %721 = vmatpush1.msra.mxu0 %v272
      %722 = vmatprep.subr.mxu0 0.0
      %723 = vmatpush1.msra.mxu0 %v275
      %724 = vmatprep.subr.mxu0 0.0
      %725 = vmatpush1.msra.mxu0 %v278
      %726 = vmatprep.subr.mxu0 0.0
      %727 = vmatpush1.msra.mxu0 %v281
      %728 = vmatprep.subr.mxu0 0.0
      %729 = vmatpush1.msra.mxu0 %v284
      %730 = vmatprep.subr.mxu0 0.0
      %731 = vmatpush1.msra.mxu0 %v287
      %732 = vmatprep.subr.mxu0 0.0
      %733 = vmatpush1.msra.mxu0 %v290
      %734 = vmatprep.subr.mxu0 0.0
      %735 = vmatpush1.msra.mxu0 %v293
      %736 = vmatprep.subr.mxu0 0.0
      %737 = vmatpush1.msra.mxu0 %v296
      %738 = vmatprep.subr.mxu0 0.0
      %739 = vmatpush1.msra.mxu0 %v299
      %740 = vmatprep.subr.mxu0 0.0
      %741 = vmatpush1.msra.mxu0 %v302
      %742 = vmatprep.subr.mxu0 0.0
      %743 = vmatpush1.msra.mxu0 %v305
      %744 = vmatprep.subr.mxu0 0.0
      %745 = vmatpush1.msra.mxu0 %v308
      %746 = vmatprep.subr.mxu0 0.0
      %747 = vmatpush1.msra.mxu0 %v311
      %748 = vmatprep.subr.mxu0 0.0
      %749 = vmatpush1.msra.mxu0 %v314
      %750 = vmatprep.subr.mxu0 0.0
      %751 = vmatpush1.msra.mxu0 %v317
      %752 = vmatprep.mubr.f32.mxu0 %v445
      %753 = vmatmul.mubr.f32.gmra.mrb[0].mxu0 %v443
      %v754 = vpop.f32.mrb[0].mxu0
      %v755 = vadd.f32 0.0, %v754
      %v756 = vpop.f32.mrb[0].mxu0
      %757 = vmatprep.mubr.f32.mxu0 %v451
      %758 = vmatmul.mubr.f32.gmra.mrb[0].mxu0 %v449
      %v759 = vpop.f32.mrb[0].mxu0
      %v760 = vadd.f32 0.0, %v759
      %v761 = vpop.f32.mrb[0].mxu0
      %762 = vdwg.mxu0
      %763 = vmatprep.subr.mxu0 0.0
      %764 = vmatpush1.msra.mxu0 %v320
      %765 = vmatprep.subr.mxu0 0.0
      %766 = vmatpush1.msra.mxu0 %v323
      %767 = vmatprep.subr.mxu0 0.0
      %768 = vmatpush1.msra.mxu0 %v326
      %769 = vmatprep.subr.mxu0 0.0
      %770 = vmatpush1.msra.mxu0 %v329
      %771 = vmatprep.subr.mxu0 0.0
      %772 = vmatpush1.msra.mxu0 %v332
      %773 = vmatprep.subr.mxu0 0.0
      %774 = vmatpush1.msra.mxu0 %v335
      %775 = vmatprep.subr.mxu0 0.0
      %776 = vmatpush1.msra.mxu0 %v338
      %777 = vmatprep.subr.mxu0 0.0
      %778 = vmatpush1.msra.mxu0 %v341
      %779 = vmatprep.subr.mxu0 0.0
      %780 = vmatpush1.msra.mxu0 0.0
      %781 = vmatprep.subr.mxu0 0.0
      %782 = vmatpush1.msra.mxu0 0.0
      %783 = vmatprep.subr.mxu0 0.0
      %784 = vmatpush1.msra.mxu0 0.0
      %785 = vmatprep.subr.mxu0 0.0
      %786 = vmatpush1.msra.mxu0 0.0
      %787 = vmatprep.subr.mxu0 0.0
      %788 = vmatpush1.msra.mxu0 0.0
      %789 = vmatprep.subr.mxu0 0.0
      %790 = vmatpush1.msra.mxu0 0.0
      %791 = vmatprep.subr.mxu0 0.0
      %792 = vmatpush1.msra.mxu0 0.0
      %793 = vmatprep.subr.mxu0 0.0
      %794 = vmatpush1.msra.mxu0 0.0
      %795 = vmatprep.subr.mxu0 0.0
      %796 = vmatpush1.msra.mxu0 0.0
      %797 = vmatprep.subr.mxu0 0.0
      %798 = vmatpush1.msra.mxu0 0.0
      %799 = vmatprep.subr.mxu0 0.0
      %800 = vmatpush1.msra.mxu0 0.0
      %801 = vmatprep.subr.mxu0 0.0
      %802 = vmatpush1.msra.mxu0 0.0
      %803 = vmatprep.subr.mxu0 0.0
      %804 = vmatpush1.msra.mxu0 0.0
      %805 = vmatprep.subr.mxu0 0.0
      %806 = vmatpush1.msra.mxu0 0.0
      %807 = vmatprep.subr.mxu0 0.0
      %808 = vmatpush1.msra.mxu0 0.0
      %809 = vmatprep.subr.mxu0 0.0
      %810 = vmatpush1.msra.mxu0 0.0
      %811 = vmatprep.subr.mxu0 0.0
      %812 = vmatpush1.msra.mxu0 0.0
      %813 = vmatprep.subr.mxu0 0.0
      %814 = vmatpush1.msra.mxu0 0.0
      %815 = vmatprep.subr.mxu0 0.0
      %816 = vmatpush1.msra.mxu0 0.0
      %817 = vmatprep.subr.mxu0 0.0
      %818 = vmatpush1.msra.mxu0 0.0
      %819 = vmatprep.subr.mxu0 0.0
      %820 = vmatpush1.msra.mxu0 0.0
      %821 = vmatprep.subr.mxu0 0.0
      %822 = vmatpush1.msra.mxu0 0.0
      %823 = vmatprep.subr.mxu0 0.0
      %824 = vmatpush1.msra.mxu0 0.0
      %825 = vmatprep.subr.mxu0 0.0
      %826 = vmatpush1.msra.mxu0 0.0
      %827 = vmatprep.mubr.f32.mxu0 0.0
      %828 = vmatmul.mubr.f32.gmra.mrb[0].mxu0 %v529
      %v829 = vpop.f32.mrb[0].mxu0
      %v830 = vadd.f32 %v755, %v829
      %v831 = vpop.f32.mrb[0].mxu0
      %832 = vmatprep.mubr.f32.mxu0 0.0
      %833 = vmatmul.mubr.f32.gmra.mrb[0].mxu0 %v532
      %v834 = vpop.f32.mrb[0].mxu0
      %v835 = vadd.f32 %v760, %v834
      %v836 = vpop.f32.mrb[0].mxu0
      %837 = vdwg.mxu0
      %v838 = vmul.f32 %v678, %v678
      %v839 = vmul.f32 %v684, %v684
      %842 = vrot.lane.b32.xlu0 %v678, 64
      %v843 = vpop.permute.xlu0 %842
      %844 = vrot.lane.b32.xlu0 %v684, 64
      %v845 = vpop.permute.xlu0 %844
      %v848 = vmul.f32 %v678, %v843
      %v849 = vmul.f32 %v684, %v845
      %v850 = vsub.f32 %v680, %v838
      %v851 = vsub.f32 %v686, %v839
      %v852 = vsub.f32 %v830, %v848
      %v853 = vsub.f32 %v835, %v849
      %v854 = vmul.f32 %v848, 2.0
      %v855 = vmul.f32 %v849, 2.0
      %v856 = vadd.f32 %v854, 0.0001
      %v857 = vadd.f32 %v855, 0.0001
      %v858 = vmul.f32 %v852, 2.0
      %v859 = vmul.f32 %v853, 2.0
      %v860 = vadd.f32 %v858, 0.0009
      %v861 = vadd.f32 %v859, 0.0009
      %v862 = vmul.f32 %v856, %v860
      %v863 = vmul.f32 %v857, %v861
      %866 = vrot.lane.b32.xlu0 %v838, 64
      %v867 = vpop.permute.xlu0 %866
      %868 = vrot.lane.b32.xlu0 %v839, 64
      %v869 = vpop.permute.xlu0 %868
      %v872 = vadd.f32 %v838, %v867
      %v873 = vadd.f32 %v839, %v869
      %v874 = vadd.f32 %v872, 0.0001
      %v875 = vadd.f32 %v873, 0.0001
      %878 = vrot.lane.b32.xlu0 %v850, 64
      %v879 = vpop.permute.xlu0 %878
      %880 = vrot.lane.b32.xlu0 %v851, 64
      %v881 = vpop.permute.xlu0 %880
      %v884 = vadd.f32 %v850, %v879
      %v885 = vadd.f32 %v851, %v881
      %v886 = vadd.f32 %v884, 0.0009
      %v887 = vadd.f32 %v885, 0.0009
      %v888 = vmul.f32 %v874, %v886
      %v889 = vmul.f32 %v875, %v887
      %v890 = vrcp.pop %v888
      %v891 = vrcp.pop %v889
      %v892 = vmul.f32 %v862, %v890
      %v893 = vmul.f32 %v863, %v891
      %v894 = vsel %vm364, %v892, 0.0
      %v895 = vsel %vm364, %v893, 0.0
      %v896 = vadd.f32 %v894, %v895
      %897 = vadd.xlane.f32.xlu0 %v896
      %v898 = vpop.xlane.xlu0 %897
      %v899 = vrot.slane %v898, 4
      %v900 = vadd.f32 %v898, %v899
      %v901 = vrot.slane %v900, 2
      %v902 = vadd.f32 %v900, %v901
      %v903 = vrot.slane %v902, 1
      %v904 = vadd.f32 %v902, %v903
      %s905 = vtos %v904
      %v906 = vstv %s905
      %907 = vst [vmem:[%s215] sm:$0xff] %v906
      %p908 = scmp.lt.s32.totalorder %s15, 1
      %s909 = scalar_select %p908, %s15, 1
      %s910 = smul.addr %s909, 8
      %s911 = scalar_lea.vmem %s4, %s910
      // Predicated region
      $region37: #{ssim.1} parent=35 // pred_check
        %p912 = pneg %p127
      $region38: #{ssim.1} parent=35 // pred_check_branch
        %914 = sbr.rel (%p912) target = $region40
      $region39: #{ssim.1} parent=35 // pred_region
        _
      $region40: #{ssim.1} parent=35 // pred_fallthru
        _
    $region36: #{ssim.1} parent=5 // pred_fallthru
      _
    %p915 = scmp.le.s32.totalorder 2, %s10
    // Predicated region
    $region41: #{ssim.1} parent=5 // pred_check
      %p916 = pneg %p915
    $region42: #{ssim.1} parent=5 // pred_check_branch
      %918 = sbr.rel (%p916) target = $region44
    $region43: #{ssim.1} parent=5 // pred_region
      %s919 = ssub.s32 %s10, 2
      // Predicated region
      $region45: #{ssim.1} parent=43 // pred_check
        %p920 = pneg %p133
      $region46: #{ssim.1} parent=43 // pred_check_branch
        %922 = sbr.rel (%p920) target = $region48
      $region47: #{ssim.1} parent=43 // pred_region
        %p923 = scmp.lt.s32.totalorder %s16, 1
        %s924 = scalar_select %p923, %s16, 1
        %s925 = smul.addr %s924, 8
        %s926 = scalar_lea.vmem %s4, %s925
      $region48: #{ssim.1} parent=43 // pred_fallthru
        _
    $region44: #{ssim.1} parent=5 // pred_fallthru
      _
  $region6: #{ssim.1} parent=0 // loop_footer
    %s14 = sadd.s32 1, %s10
  $region7: #{ssim.1} parent=0 // loop_footer_branch
    %9 = sbr.rel target = $region3
  $region8: #{ssim.1} parent=0 // loop_exit
    _

</llo_original>
